<compile_context>
chip_gen: v7x
topology: tpu7x:2x2x1
jax: 0.10.0
libtpu: 0.0.40
codegen_flags: <defaults>
</compile_context>

<pallas_src>
import jax
import jax.numpy as jnp
from jax.experimental import pallas as pl
from jax.experimental.pallas import tpu as pltpu

LOG_STD_MIN = -5.0
LOG_STD_MAX = 2.0

# Lane-dense widths, widest first (all multiples of 128 -> unmasked full-lane vst).
_LANE_CANDIDATES = (2048, 1024, 512, 256, 128)


def _actor_kernel(mu_ref, std_ref, mean_ref):
    # f32 internal math everywhere (v5e has no bf16 VPU/EUP; with f32 I/O the
    # kernel is HBM-bound on every generation so the upcast is free).
    # TODO(synk): with bf16 I/O on v7x, keeping tanh/exp in bf16 roughly
    # doubles EUP throughput; left in f32 for parity with the PyTorch ref.
    mu = mu_ref[...].astype(jnp.float32)
    t = jnp.tanh(mu)                                   # single tanh, reused
    mean_ref[...] = t.astype(mean_ref.dtype)           # SquashedNormal.mean == tanh(loc)
    log_std = LOG_STD_MIN + 0.5 * (LOG_STD_MAX - LOG_STD_MIN) * (t + 1.0)
    std_ref[...] = jnp.exp(log_std).astype(std_ref.dtype)


def _chip_params():
    """Per-generation tiling parameters.

    Returns (target_tile_bytes_per_buffer, vmem_limit_bytes, num_tensorcores).
    Defaults assume a 128-MiB-VMEM single-TensorCore part (v5e/v6e); a
    smaller-VMEM part (v7x: 64 MiB/TC, 2 TCs/chip) gets a tighter VMEM limit
    and a 2-block minimum grid so both TensorCores get work.
    """
    target_tile = 4 * 1024 * 1024
    vmem_limit = 48 * 1024 * 1024
    num_cores = 1
    try:
        info = pltpu.get_tpu_info()
        vmem_bytes = getattr(info, "vmem_capacity_bytes", None)
        if vmem_bytes is not None and vmem_bytes <= 96 * 1024 * 1024:
            vmem_limit = 40 * 1024 * 1024
            num_cores = 2
    except Exception:
        pass  # interpret mode / unknown platform: keep conservative defaults
    return target_tile, vmem_limit, num_cores


def _layout_2d(mu):
    """Reshape mu to a 2-D (rows, lanes) slab with no extra HBM traffic.

    Prefers the widest lane width (multiple of 128) that divides the element
    count; otherwise keeps the natural (prod(leading), last_dim) shape and
    relies on a full-extent last-dim block (masked stores for that rare path,
    but no jnp.pad / slice HBM round trips).
    """
    n = mu.size
    for lanes in _LANE_CANDIDATES:
        if n % lanes == 0:
            return mu.reshape(n // lanes, lanes)
    if mu.ndim >= 2:
        return mu.reshape(-1, mu.shape[-1])
    return mu.reshape(1, max(n, 1))


def _row_tiling(rows, lanes, elem_bytes, target_tile, num_cores):
    """Pick (row_block, grid): balanced block count first, then block height."""
    sub = 8 if elem_bytes >= 4 else (16 if elem_bytes == 2 else 32)
    total_bytes = rows * lanes * elem_bytes
    if rows <= sub:
        return rows, (1,)                                  # full-extent block
    nblocks = max(1, -(-total_bytes // target_tile))       # cdiv
    if num_cores >= 2 and total_bytes > (1 << 20):
        # Engage both TensorCores and keep per-core block counts equal.
        nblocks = max(nblocks, num_cores)
        nblocks = -(-nblocks // num_cores) * num_cores
    row_block = -(-rows // nblocks)                        # balanced split
    row_block = -(-row_block // sub) * sub                 # sublane-aligned
    if row_block >= rows:
        return rows, (1,)
    return row_block, (pl.cdiv(rows, row_block),)


def diag_gaussian_actor_forward(mu, out_dtype=None):
    """Returns (loc, std, squashed_mean) defining SquashedNormal(loc=mu, std).

    loc is mu itself (identity) and is returned from the wrapper so the kernel
    spends no HBM bandwidth on it. out_dtype lets callers request e.g. bf16
    outputs (halves write traffic); defaults to mu.dtype.
    """
    orig_shape = mu.shape
    out_dtype = jnp.dtype(out_dtype) if out_dtype is not None else mu.dtype

    x2d = _layout_2d(mu)
    rows, lanes = x2d.shape
    elem_bytes = max(jnp.dtype(mu.dtype).itemsize, jnp.dtype(out_dtype).itemsize)

    target_tile, vmem_limit, num_cores = _chip_params()
    row_block, grid = _row_tiling(rows, lanes, elem_bytes, target_tile, num_cores)

    spec = pl.BlockSpec((row_block, lanes), lambda i: (i, 0))
    out_sd = jax.ShapeDtypeStruct((rows, lanes), out_dtype)

    std2d, mean2d = pl.pallas_call(
        _actor_kernel,
        out_shape=(out_sd, out_sd),
        grid_spec=pl.GridSpec(grid=grid, in_specs=[spec], out_specs=(spec, spec)),
        compiler_params=pltpu.CompilerParams(
            dimension_semantics=("parallel",),
            vmem_limit_bytes=vmem_limit),
    )(x2d)

    return mu, std2d.reshape(orig_shape), mean2d.reshape(orig_shape)


class DiagGaussianActorPallas:
    """Pallas port of DiagGaussianActor.

    The nn.Linear parameters (mu / log_std heads) are initialized to mirror
    __init__, but — exactly like the PyTorch reference — they are NOT used in
    forward().
    """

    def __init__(self, hidden_dim=1280, act_dim=18,
                 log_std_bounds=(-5.0, 2.0), key=None):
        if key is None:
            key = jax.random.PRNGKey(0)
        k1, k2 = jax.random.split(key)
        ortho = jax.nn.initializers.orthogonal()
        self.mu_w = ortho(k1, (act_dim, hidden_dim), jnp.float32)
        self.mu_b = jnp.zeros((act_dim,), jnp.float32)
        self.log_std_w = ortho(k2, (act_dim, hidden_dim), jnp.float32)
        self.log_std_b = jnp.zeros((act_dim,), jnp.float32)
        self.log_std_bounds = log_std_bounds

    def __call__(self, mu):
        # Arrays defining SquashedNormal(loc=mu, std=std), plus tanh(loc).
        return diag_gaussian_actor_forward(mu)


def _reference(mu):
    mu32 = mu.astype(jnp.float32)
    t = jnp.tanh(mu32)
    log_std = LOG_STD_MIN + 0.5 * (LOG_STD_MAX - LOG_STD_MIN) * (t + 1.0)
    std = jnp.exp(log_std)
    return mu, std.astype(mu.dtype), t.astype(mu.dtype)


def _check(mu):
    loc, std, mean = diag_gaussian_actor_forward(mu)
    jax.block_until_ready((loc, std, mean))
    ref_loc, ref_std, ref_mean = _reference(mu)
    assert loc.shape == mu.shape and std.shape == mu.shape and mean.shape == mu.shape
    assert jnp.allclose(loc, ref_loc, atol=1e-6)
    assert jnp.allclose(std, ref_std, atol=1e-5, rtol=1e-5)
    assert jnp.allclose(mean, ref_mean, atol=1e-6)


if __name__ == "__main__":
    key = jax.random.PRNGKey(0)

    # Small shape consistent with the module's (batch, seq, act_dim-ish) inputs.
    B, T, D = 2, 8, 32
    mu_small = jax.random.normal(key, (B, T, D), dtype=jnp.float32)
    actor = DiagGaussianActorPallas(hidden_dim=D, act_dim=18, key=key)
    loc, std, mean = actor(mu_small)
    jax.block_until_ready((loc, std, mean))
    _check(mu_small)

    # Exercise the balanced multi-block path (grid > 1 on all generations).
    mu_big = jax.random.normal(jax.random.PRNGKey(1), (4096, 512), dtype=jnp.float32)
    _check(mu_big)

    # Exercise the non-128-divisible path (full-extent last-dim block, no pad).
    mu_odd = jax.random.normal(jax.random.PRNGKey(2), (3, 7, 5), dtype=jnp.float32)
    _check(mu_odd)

    print("KERNEL_OK")
</pallas_src>

<mosaic_0001>
module attributes {stable_mosaic.version = 11 : i64} {
  func.func @_actor_kernel(%arg0: i32, %arg1: memref<1x512xf32, #tpu.memory_space<vmem>>, %arg2: memref<1x512xf32, #tpu.memory_space<vmem>>, %arg3: memref<1x512xf32, #tpu.memory_space<vmem>>) attributes {dimension_semantics = [#tpu.dimension_semantics<parallel>], iteration_bounds = array<i64: 1>, scalar_prefetch = 0 : i64, scratch_operands = 0 : i64, tpu.core_type = #tpu.core_type<tc>, window_params = [{transform_indices = @transform_0, window_bounds = array<i64: 1, 512>}, {transform_indices = @transform_1, window_bounds = array<i64: 1, 512>}, {transform_indices = @transform_2, window_bounds = array<i64: 1, 512>}]} {
    %c0 = arith.constant 0 : index
    %c0_0 = arith.constant 0 : index
    %0 = vector.load %arg1[%c0, %c0_0] : memref<1x512xf32, #tpu.memory_space<vmem>>, vector<1x512xf32>
    %1 = math.tanh %0 : vector<1x512xf32>
    %c0_1 = arith.constant 0 : index
    %c0_2 = arith.constant 0 : index
    %2 = vector.load %arg3[%c0_1, %c0_2] : memref<1x512xf32, #tpu.memory_space<vmem>>, vector<1x512xf32>
    tpu.vector_store %arg3[%c0_1, %c0_2], %1 {strides = array<i32>} : memref<1x512xf32, #tpu.memory_space<vmem>>, vector<1x512xf32>,
    %cst = arith.constant 1.000000e+00 : f32
    %3 = vector.broadcast %cst : f32 to vector<1x512xf32>
    %4 = arith.addf %1, %3 : vector<1x512xf32>
    %cst_3 = arith.constant 3.500000e+00 : f32
    %5 = vector.broadcast %cst_3 : f32 to vector<1x512xf32>
    %6 = arith.mulf %5, %4 : vector<1x512xf32>
    %cst_4 = arith.constant -5.000000e+00 : f32
    %7 = vector.broadcast %cst_4 : f32 to vector<1x512xf32>
    %8 = arith.addf %7, %6 : vector<1x512xf32>
    %9 = math.exp %8 : vector<1x512xf32>
    %c0_5 = arith.constant 0 : index
    %c0_6 = arith.constant 0 : index
    %10 = vector.load %arg2[%c0_5, %c0_6] : memref<1x512xf32, #tpu.memory_space<vmem>>, vector<1x512xf32>
    tpu.vector_store %arg2[%c0_5, %c0_6], %9 {strides = array<i32>} : memref<1x512xf32, #tpu.memory_space<vmem>>, vector<1x512xf32>,
    return
  }
  func.func @transform_0(%arg0: i32) -> (i32, i32) {
    %c0_i32 = arith.constant 0 : i32
    %c0_i32_0 = arith.constant 0 : i32
    return %arg0, %c0_i32 : i32, i32
  }
  func.func @transform_1(%arg0: i32) -> (i32, i32) {
    %c0_i32 = arith.constant 0 : i32
    %c0_i32_0 = arith.constant 0 : i32
    return %arg0, %c0_i32 : i32, i32
  }
  func.func @transform_2(%arg0: i32) -> (i32, i32) {
    %c0_i32 = arith.constant 0 : i32
    %c0_i32_0 = arith.constant 0 : i32
    return %arg0, %c0_i32 : i32, i32
  }
}

</mosaic_0001>

<llo_original>
// kernel: tpu_custom_call.1
$region0: #{tpu_custom_call.1}
  #allocation0 [shape = 'u32[]', space=smem, size = 0x4, offset = 0x4, fixed_abs, tag = 'smem constant byte address 0x4 - core index']
  #allocation1 [shape = 'u32[144,128]{1,0:T(1,128)}', space=vmem, size = 0x12000, scoped, tag = 'internal scratch']
  %s0 = inlined_call_operand.hbm [shape: f32[1,512], index: 0, kind: input, shape index: {}]
  %s1 = inlined_call_operand.hbm [shape: f32[1,512], index: 1, kind: output, shape index: {0}]
  %s2 = inlined_call_operand.hbm [shape: f32[1,512], index: 2, kind: output, shape index: {1}]
  %3 = xla_tuple %s1, %s2
  %s4 = sld [smem:[#allocation0]]
  $region26: #{tpu_custom_call.1} parent=0
    _
  %s6 = ssub.s32 1, %s4
  %s7 = scalar_select 0, %s6, %s4
  $region1: #{tpu_custom_call.1} parent=0
    #allocation2 [shape = 'u8[2048]{0}', space=vmem, size = 0x800, scoped, tag = 'input window, operand 0, single buffered']
    #allocation3 [shape = 's32[1]{0}', space=sflag, size = 0x4, scoped, tag = 'scoped memory for tpu_custom_call.1']
    #allocation4 [shape = 's32[1]{0}', space=sflag, size = 0x4, scoped, tag = 'scoped memory for tpu_custom_call.1']
    #allocation5 [shape = 'u8[2048]{0}', space=vmem, size = 0x800, scoped, tag = 'output window, operand 0, single buffered']
    #allocation6 [shape = 'u8[2048]{0}', space=vmem, size = 0x800, scoped, tag = 'output window, operand 1, single buffered']
    #allocation7 [shape = 's32[1]{0}', space=sflag, size = 0x4, scoped, tag = 'scoped memory for tpu_custom_call.1']
    %8 = vsyncpa [#allocation3], 0
    %9 = vsyncpa [#allocation4], 0
    %10 = vsyncpa [#allocation7], 0
    // Predicated region
    $region2: #{tpu_custom_call.1} parent=1 // pred_check
      _
    $region3: #{tpu_custom_call.1} parent=1 // pred_check_branch
      %12 = sbr.rel (0) target = $region5
    $region4: #{tpu_custom_call.1} parent=1 // pred_region
      %s14 = ssub.s32 64, 64
      %15 = vsyncadd [#allocation3], %s14
      %s17 = sshll.u32 [#allocation2], 4
      %s18 = int_to_ptr.vmem [resolvable:$true] %s17
      %20 = dma.hbm_to_vmem [thread:$0]  %s0, 64, %s18, [#allocation3]
    $region5: #{tpu_custom_call.1} parent=1 // pred_fallthru
      _
    // Predicated region
    $region6: #{tpu_custom_call.1} parent=1 // pred_check
      _
    $region7: #{tpu_custom_call.1} parent=1 // pred_check_branch
      %22 = sbr.rel (0) target = $region9
    $region8: #{tpu_custom_call.1} parent=1 // pred_region
      %23 = dma.done [#allocation3], 64
    $region9: #{tpu_custom_call.1} parent=1 // pred_fallthru
      _
    %v24 = vld [vmem:[#allocation2] sm:$0xf]
    %v25 = vtanh.pop %v24
    %v26 = vlaneseq
    %vm27 = vcmp.ge.s32.totalorder %v26, 0
    %vm28 = vcmp.lt.s32.totalorder %v26, 512
    %vm29 = vmand %vm27, %vm28
    %30 = vst.msk [vmem:[#allocation6] sm:$0xf] %vm29, %v25
    %v31 = vadd.f32 %v25, 1.0
    %v32 = vmul.f32 %v31, 3.5
    %v33 = vadd.f32 %v32, -5.0
    %v34 = vmul.f32 %v33, 1.442695
    %v35 = vpow.pop %v34
    %36 = vst.msk [vmem:[#allocation5] sm:$0xf] %vm29, %v35
    // Predicated region
    $region10: #{tpu_custom_call.1} parent=1 // pred_check
      _
    $region11: #{tpu_custom_call.1} parent=1 // pred_check_branch
      %38 = sbr.rel (0) target = $region13
    $region12: #{tpu_custom_call.1} parent=1 // pred_region
      %s40 = ssub.s32 64, 64
      %41 = vsyncadd [#allocation4], %s40
      %s43 = sshll.u32 [#allocation5], 4
      %s44 = int_to_ptr.vmem [resolvable:$true] %s43
      %46 = dma.vmem_to_hbm [thread:$0]  %s44, 64, %s1, [#allocation4]
    $region13: #{tpu_custom_call.1} parent=1 // pred_fallthru
      _
    // Predicated region
    $region14: #{tpu_custom_call.1} parent=1 // pred_check
      _
    $region15: #{tpu_custom_call.1} parent=1 // pred_check_branch
      %48 = sbr.rel (0) target = $region17
    $region16: #{tpu_custom_call.1} parent=1 // pred_region
      %s50 = ssub.s32 64, 64
      %51 = vsyncadd [#allocation7], %s50
      %s53 = sshll.u32 [#allocation6], 4
      %s54 = int_to_ptr.vmem [resolvable:$true] %s53
      %56 = dma.vmem_to_hbm [thread:$0]  %s54, 64, %s2, [#allocation7]
    $region17: #{tpu_custom_call.1} parent=1 // pred_fallthru
      _
    // Predicated region
    $region18: #{tpu_custom_call.1} parent=1 // pred_check
      _
    $region19: #{tpu_custom_call.1} parent=1 // pred_check_branch
      %58 = sbr.rel (0) target = $region21
    $region20: #{tpu_custom_call.1} parent=1 // pred_region
      %59 = dma.done [#allocation4], 64
    $region21: #{tpu_custom_call.1} parent=1 // pred_fallthru
      _
    // Predicated region
    $region22: #{tpu_custom_call.1} parent=1 // pred_check
      _
    $region23: #{tpu_custom_call.1} parent=1 // pred_check_branch
      %61 = sbr.rel (0) target = $region25
    $region24: #{tpu_custom_call.1} parent=1 // pred_region
      %62 = dma.done [#allocation7], 64
    $region25: #{tpu_custom_call.1} parent=1 // pred_fallthru
      _
    %63 = vsyncpa [#allocation3], 1
    %64 = vsyncpa [#allocation4], 1
    %65 = vsyncpa [#allocation7], 1

</llo_original>
